<compile_context>
chip_gen: v7x
topology: tpu7x:2x2x1
jax: 0.10.0
libtpu: 0.0.40
codegen_flags: <defaults>
</compile_context>

<pallas_src>
import jax
import jax.numpy as jnp
import numpy as np
from jax.experimental import pallas as pl
from jax.experimental.pallas import tpu as pltpu


def mlp_reward_kernel(obs_ref, act_ref, w1o_ref, w1a_ref, b1_ref,
                      w2_ref, b2_ref, wl_ref, bl_ref, out_ref):
    # Layer 1: [obs, act] @ W1 + b1, ReLU — concat folded into two MXU dots
    # summed in the f32 accumulator (no wrapper-side concat copy).
    h1 = jnp.dot(obs_ref[...], w1o_ref[...], preferred_element_type=jnp.float32)
    h1 = h1 + jnp.dot(act_ref[...], w1a_ref[...], preferred_element_type=jnp.float32)
    h1 = jnp.maximum(h1 + b1_ref[...], 0.0)

    # Layer 2: h1 @ W2 + b2, ReLU
    h2 = jnp.dot(h1.astype(w2_ref.dtype), w2_ref[...],
                 preferred_element_type=jnp.float32)
    h2 = jnp.maximum(h2 + b2_ref[...], 0.0)

    # Final Linear(H2, 1): VPU multiply + lane reduction (an N=1 MXU matmul
    # would waste 255/256 of the output lanes).
    v = jnp.sum(h2 * wl_ref[...], axis=-1, keepdims=True) + bl_ref[...]
    out_ref[...] = v.astype(out_ref.dtype)


def _round_up(n, m):
    return ((n + m - 1) // m) * m


def _cdiv(a, b):
    return (a + b - 1) // b


def mlp_reward_forward(obs, actions, params, *, block_b=4096,
                       compute_dtype=jnp.float32):
    """obs: (B, obs_dim), actions: (B, action_dim) -> (B, 1) f32.

    compute_dtype controls only the matmul operand dtype (obs, actions, W1, W2).
    Biases, accumulation, ReLU and the final projection always run in f32.
    (bf16 only pays off when the inputs already arrive in bf16 — the cast of an
    f32 stream is itself extra HBM traffic.)
    """
    w1, b1, w2, b2, wl, bl = (params[k] for k in ("w1", "b1", "w2", "b2", "wl", "bl"))
    B, obs_dim = obs.shape
    action_dim = actions.shape[1]
    in_dim = w1.shape[0]
    assert in_dim == obs_dim + action_dim
    H1 = w1.shape[1]
    H2 = w2.shape[1]

    # --- batch tiling: even split, multiple of 128 (f32/bf16 sublane rules) ---
    B_pad128 = _round_up(max(B, 1), 128)
    n_tiles = _cdiv(B_pad128, block_b)
    TB = _round_up(_cdiv(B_pad128, n_tiles), 128)
    B_pad = n_tiles * TB

    obs_c = obs.astype(compute_dtype)
    act_c = actions.astype(compute_dtype)
    if B_pad != B:
        obs_c = jnp.pad(obs_c, ((0, B_pad - B), (0, 0)))
        act_c = jnp.pad(act_c, ((0, B_pad - B), (0, 0)))

    # Split W1 by input block so the concat happens "for free" inside the kernel.
    w1o = w1[:obs_dim].astype(compute_dtype)     # (obs_dim, H1)
    w1a = w1[obs_dim:].astype(compute_dtype)     # (action_dim, H1)
    w2c = w2.astype(compute_dtype)
    b1r = b1.reshape(1, H1).astype(jnp.float32)
    b2r = b2.reshape(1, H2).astype(jnp.float32)
    wlr = wl.reshape(1, H2).astype(jnp.float32)
    blr = bl.reshape(1, 1).astype(jnp.float32)

    op_bytes = int(jnp.dtype(compute_dtype).itemsize)
    cost = pl.CostEstimate(
        flops=int(2 * B_pad * (in_dim * H1 + H1 * H2 + H2)),
        transcendentals=0,
        bytes_accessed=int(B_pad * in_dim * op_bytes              # streamed inputs
                           + B_pad * 4                             # output
                           + (in_dim * H1 + H1 * H2) * op_bytes    # weights
                           + (H1 + 2 * H2 + 1) * 4),               # biases / wl
    )

    out = pl.pallas_call(
        mlp_reward_kernel,
        out_shape=jax.ShapeDtypeStruct((B_pad, 1), jnp.float32),
        grid_spec=pl.GridSpec(
            grid=(n_tiles,),
            in_specs=[
                pl.BlockSpec((TB, obs_dim),    lambda i: (i, 0)),  # obs streams per tile
                pl.BlockSpec((TB, action_dim), lambda i: (i, 0)),  # actions stream per tile
                pl.BlockSpec((obs_dim, H1),    lambda i: (0, 0)),  # weights stay VMEM-resident
                pl.BlockSpec((action_dim, H1), lambda i: (0, 0)),
                pl.BlockSpec((1, H1),          lambda i: (0, 0)),
                pl.BlockSpec((H1, H2),         lambda i: (0, 0)),
                pl.BlockSpec((1, H2),          lambda i: (0, 0)),
                pl.BlockSpec((1, H2),          lambda i: (0, 0)),
                pl.BlockSpec((1, 1),           lambda i: (0, 0)),
            ],
            out_specs=pl.BlockSpec((TB, 1), lambda i: (i, 0)),
        ),
        compiler_params=pltpu.CompilerParams(
            dimension_semantics=("parallel",)),   # megacore split on v7x; no-op on v5e/v6e
        cost_estimate=cost,
    )(obs_c, act_c, w1o, w1a, b1r, w2c, b2r, wlr, blr)

    return out[:B]


def init_params(key, obs_dim, action_dim, hidden_dims):
    """Deterministic synthetic parameters (shapes match the nn.Linear layers)."""
    in_dim = obs_dim + action_dim
    h1, h2 = hidden_dims
    k1, k2, k3, k4, k5, k6 = jax.random.split(key, 6)
    scale = 0.1
    return dict(
        w1=scale * jax.random.normal(k1, (in_dim, h1), jnp.float32),
        b1=scale * jax.random.normal(k2, (h1,), jnp.float32),
        w2=scale * jax.random.normal(k3, (h1, h2), jnp.float32),
        b2=scale * jax.random.normal(k4, (h2,), jnp.float32),
        wl=scale * jax.random.normal(k5, (h2, 1), jnp.float32),
        bl=scale * jax.random.normal(k6, (1,), jnp.float32),
    )


def reference_forward(obs, actions, params):
    """Pure-JAX reference matching the PyTorch module (full-precision matmuls)."""
    hi = jax.lax.Precision.HIGHEST
    x = jnp.concatenate([obs, actions], axis=1)
    h = jnp.maximum(jnp.dot(x, params["w1"], precision=hi) + params["b1"], 0.0)
    h = jnp.maximum(jnp.dot(h, params["w2"], precision=hi) + params["b2"], 0.0)
    return jnp.dot(h, params["wl"], precision=hi) + params["bl"]


if __name__ == "__main__":
    obs_shape = (16,)              # already-flat observation features
    obs_dim = int(np.prod(obs_shape))
    action_dim = 4
    hidden_dims = (32, 32)

    key = jax.random.PRNGKey(0)
    kp, ko, ka, ko2, ka2 = jax.random.split(key, 5)
    params = init_params(kp, obs_dim, action_dim, hidden_dims)

    # --- small batch (spec-sized) -------------------------------------------
    B = 2
    obs = jax.random.normal(ko, (B, obs_dim), jnp.float32)
    actions = jax.random.normal(ka, (B, action_dim), jnp.float32)
    ref = reference_forward(obs, actions, params)

    vals = jax.block_until_ready(mlp_reward_forward(obs, actions, params))
    assert vals.shape == (B, 1)
    np.testing.assert_allclose(np.asarray(vals), np.asarray(ref), rtol=1e-5, atol=1e-5)

    # bf16 matmul-operand path (useful when inputs are produced in bf16 upstream).
    vals_bf16 = jax.block_until_ready(
        mlp_reward_forward(obs, actions, params, compute_dtype=jnp.bfloat16))
    np.testing.assert_allclose(np.asarray(vals_bf16), np.asarray(ref),
                               rtol=2e-2, atol=2e-2)

    # --- larger batch: exercises multi-tile "parallel" grid + padding --------
    B2 = 2053
    obs2 = jax.random.normal(ko2, (B2, obs_dim), jnp.float32)
    actions2 = jax.random.normal(ka2, (B2, action_dim), jnp.float32)
    ref2 = reference_forward(obs2, actions2, params)
    vals2 = jax.block_until_ready(
        mlp_reward_forward(obs2, actions2, params, block_b=1024))
    assert vals2.shape == (B2, 1)
    np.testing.assert_allclose(np.asarray(vals2), np.asarray(ref2), rtol=1e-5, atol=1e-5)

    print("KERNEL_OK")
</pallas_src>

<mosaic_0001>
module attributes {stable_mosaic.version = 11 : i64} {
  func.func @mlp_reward_kernel(%arg0: i32, %arg1: memref<128x16xf32, #tpu.memory_space<vmem>>, %arg2: memref<128x4xf32, #tpu.memory_space<vmem>>, %arg3: memref<16x32xf32, #tpu.memory_space<vmem>>, %arg4: memref<4x32xf32, #tpu.memory_space<vmem>>, %arg5: memref<1x32xf32, #tpu.memory_space<vmem>>, %arg6: memref<32x32xf32, #tpu.memory_space<vmem>>, %arg7: memref<1x32xf32, #tpu.memory_space<vmem>>, %arg8: memref<1x32xf32, #tpu.memory_space<vmem>>, %arg9: memref<1x1xf32, #tpu.memory_space<vmem>>, %arg10: memref<128x1xf32, #tpu.memory_space<vmem>>) attributes {dimension_semantics = [#tpu.dimension_semantics<parallel>], iteration_bounds = array<i64: 1>, scalar_prefetch = 0 : i64, scratch_operands = 0 : i64, tpu.core_type = #tpu.core_type<tc>, window_params = [{transform_indices = @transform_0, window_bounds = array<i64: 128, 16>}, {transform_indices = @transform_1, window_bounds = array<i64: 128, 4>}, {pipeline_mode = #tpu.pipeline_mode<synchronous>, transform_indices = @transform_2, window_bounds = array<i64: 16, 32>}, {pipeline_mode = #tpu.pipeline_mode<synchronous>, transform_indices = @transform_3, window_bounds = array<i64: 4, 32>}, {pipeline_mode = #tpu.pipeline_mode<synchronous>, transform_indices = @transform_4, window_bounds = array<i64: 1, 32>}, {pipeline_mode = #tpu.pipeline_mode<synchronous>, transform_indices = @transform_5, window_bounds = array<i64: 32, 32>}, {pipeline_mode = #tpu.pipeline_mode<synchronous>, transform_indices = @transform_6, window_bounds = array<i64: 1, 32>}, {pipeline_mode = #tpu.pipeline_mode<synchronous>, transform_indices = @transform_7, window_bounds = array<i64: 1, 32>}, {pipeline_mode = #tpu.pipeline_mode<synchronous>, transform_indices = @transform_8, window_bounds = array<i64: 1, 1>}, {transform_indices = @transform_9, window_bounds = array<i64: 128, 1>}]} {
    %c0 = arith.constant 0 : index
    %c0_0 = arith.constant 0 : index
    %0 = vector.load %arg1[%c0, %c0_0] : memref<128x16xf32, #tpu.memory_space<vmem>>, vector<128x16xf32>
    %c0_1 = arith.constant 0 : index
    %c0_2 = arith.constant 0 : index
    %1 = vector.load %arg3[%c0_1, %c0_2] : memref<16x32xf32, #tpu.memory_space<vmem>>, vector<16x32xf32>
    %cst = arith.constant dense<0.000000e+00> : vector<128x32xf32>
    %2 = tpu.matmul %0, %1, %cst {dimension_numbers = #tpu.dot_dimension_numbers<[1], [0], [0], [1], [0, 0, 1, 1], [], []>} : vector<128x16xf32>, vector<16x32xf32>, vector<128x32xf32> -> vector<128x32xf32>
    %c0_3 = arith.constant 0 : index
    %c0_4 = arith.constant 0 : index
    %3 = vector.load %arg2[%c0_3, %c0_4] : memref<128x4xf32, #tpu.memory_space<vmem>>, vector<128x4xf32>
    %c0_5 = arith.constant 0 : index
    %c0_6 = arith.constant 0 : index
    %4 = vector.load %arg4[%c0_5, %c0_6] : memref<4x32xf32, #tpu.memory_space<vmem>>, vector<4x32xf32>
    %cst_7 = arith.constant dense<0.000000e+00> : vector<128x32xf32>
    %5 = tpu.matmul %3, %4, %cst_7 {dimension_numbers = #tpu.dot_dimension_numbers<[1], [0], [0], [1], [0, 0, 1, 1], [], []>} : vector<128x4xf32>, vector<4x32xf32>, vector<128x32xf32> -> vector<128x32xf32>
    %6 = arith.addf %2, %5 : vector<128x32xf32>
    %c0_8 = arith.constant 0 : index
    %c0_9 = arith.constant 0 : index
    %7 = vector.load %arg5[%c0_8, %c0_9] : memref<1x32xf32, #tpu.memory_space<vmem>>, vector<1x32xf32>
    %8 = vector.broadcast %7 : vector<1x32xf32> to vector<128x32xf32>
    %9 = arith.addf %6, %8 : vector<128x32xf32>
    %cst_10 = arith.constant 0.000000e+00 : f32
    %10 = vector.broadcast %cst_10 : f32 to vector<128x32xf32>
    %11 = arith.maximumf %9, %10 : vector<128x32xf32>
    %c0_11 = arith.constant 0 : index
    %c0_12 = arith.constant 0 : index
    %12 = vector.load %arg6[%c0_11, %c0_12] : memref<32x32xf32, #tpu.memory_space<vmem>>, vector<32x32xf32>
    %cst_13 = arith.constant dense<0.000000e+00> : vector<128x32xf32>
    %13 = tpu.matmul %11, %12, %cst_13 {dimension_numbers = #tpu.dot_dimension_numbers<[1], [0], [0], [1], [0, 0, 1, 1], [], []>} : vector<128x32xf32>, vector<32x32xf32>, vector<128x32xf32> -> vector<128x32xf32>
    %c0_14 = arith.constant 0 : index
    %c0_15 = arith.constant 0 : index
    %14 = vector.load %arg7[%c0_14, %c0_15] : memref<1x32xf32, #tpu.memory_space<vmem>>, vector<1x32xf32>
    %15 = vector.broadcast %14 : vector<1x32xf32> to vector<128x32xf32>
    %16 = arith.addf %13, %15 : vector<128x32xf32>
    %cst_16 = arith.constant 0.000000e+00 : f32
    %17 = vector.broadcast %cst_16 : f32 to vector<128x32xf32>
    %18 = arith.maximumf %16, %17 : vector<128x32xf32>
    %c0_17 = arith.constant 0 : index
    %c0_18 = arith.constant 0 : index
    %19 = vector.load %arg8[%c0_17, %c0_18] : memref<1x32xf32, #tpu.memory_space<vmem>>, vector<1x32xf32>
    %20 = vector.broadcast %19 : vector<1x32xf32> to vector<128x32xf32>
    %21 = arith.mulf %18, %20 : vector<128x32xf32>
    %cst_19 = arith.constant dense<0.000000e+00> : vector<128xf32>
    %22 = vector.multi_reduction <add>, %21, %cst_19 [1] : vector<128x32xf32> to vector<128xf32>
    %23 = vector.shape_cast %22 : vector<128xf32> to vector<128x1xf32>
    %c0_20 = arith.constant 0 : index
    %c0_21 = arith.constant 0 : index
    %24 = vector.load %arg9[%c0_20, %c0_21] : memref<1x1xf32, #tpu.memory_space<vmem>>, vector<1x1xf32>
    %25 = vector.broadcast %24 : vector<1x1xf32> to vector<128x1xf32>
    %26 = arith.addf %23, %25 : vector<128x1xf32>
    %c0_22 = arith.constant 0 : index
    %c0_23 = arith.constant 0 : index
    %27 = vector.load %arg10[%c0_22, %c0_23] : memref<128x1xf32, #tpu.memory_space<vmem>>, vector<128x1xf32>
    tpu.vector_store %arg10[%c0_22, %c0_23], %26 {strides = array<i32>} : memref<128x1xf32, #tpu.memory_space<vmem>>, vector<128x1xf32>,
    return
  }
  func.func @transform_0(%arg0: i32) -> (i32, i32) {
    %c0_i32 = arith.constant 0 : i32
    %c0_i32_0 = arith.constant 0 : i32
    return %arg0, %c0_i32 : i32, i32
  }
  func.func @transform_1(%arg0: i32) -> (i32, i32) {
    %c0_i32 = arith.constant 0 : i32
    %c0_i32_0 = arith.constant 0 : i32
    return %arg0, %c0_i32 : i32, i32
  }
  func.func @transform_2(%arg0: i32) -> (i32, i32) {
    %c0_i32 = arith.constant 0 : i32
    %c0_i32_0 = arith.constant 0 : i32
    %c0_i32_1 = arith.constant 0 : i32
    return %c0_i32, %c0_i32_0 : i32, i32
  }
  func.func @transform_3(%arg0: i32) -> (i32, i32) {
    %c0_i32 = arith.constant 0 : i32
    %c0_i32_0 = arith.constant 0 : i32
    %c0_i32_1 = arith.constant 0 : i32
    return %c0_i32, %c0_i32_0 : i32, i32
  }
  func.func @transform_4(%arg0: i32) -> (i32, i32) {
    %c0_i32 = arith.constant 0 : i32
    %c0_i32_0 = arith.constant 0 : i32
    %c0_i32_1 = arith.constant 0 : i32
    return %c0_i32, %c0_i32_0 : i32, i32
  }
  func.func @transform_5(%arg0: i32) -> (i32, i32) {
    %c0_i32 = arith.constant 0 : i32
    %c0_i32_0 = arith.constant 0 : i32
    %c0_i32_1 = arith.constant 0 : i32
    return %c0_i32, %c0_i32_0 : i32, i32
  }
  func.func @transform_6(%arg0: i32) -> (i32, i32) {
    %c0_i32 = arith.constant 0 : i32
    %c0_i32_0 = arith.constant 0 : i32
    %c0_i32_1 = arith.constant 0 : i32
    return %c0_i32, %c0_i32_0 : i32, i32
  }
  func.func @transform_7(%arg0: i32) -> (i32, i32) {
    %c0_i32 = arith.constant 0 : i32
    %c0_i32_0 = arith.constant 0 : i32
    %c0_i32_1 = arith.constant 0 : i32
    return %c0_i32, %c0_i32_0 : i32, i32
  }
  func.func @transform_8(%arg0: i32) -> (i32, i32) {
    %c0_i32 = arith.constant 0 : i32
    %c0_i32_0 = arith.constant 0 : i32
    %c0_i32_1 = arith.constant 0 : i32
    return %c0_i32, %c0_i32_0 : i32, i32
  }
  func.func @transform_9(%arg0: i32) -> (i32, i32) {
    %c0_i32 = arith.constant 0 : i32
    %c0_i32_0 = arith.constant 0 : i32
    return %arg0, %c0_i32 : i32, i32
  }
}

</mosaic_0001>

<llo_original>
// kernel: tpu_custom_call.1
$region0: #{tpu_custom_call.1}
  #allocation0 [shape = 'u32[]', space=smem, size = 0x4, offset = 0x4, fixed_abs, tag = 'smem constant byte address 0x4 - core index']
  #allocation1 [shape = 'u32[144,128]{1,0:T(1,128)}', space=vmem, size = 0x12000, scoped, tag = 'internal scratch']
  #allocation2 [shape = 'f32[1,1]{1,0:T(1,128)S(1)}', space=vmem, size = 0x200, scoped, tag = 'scoped memory for tpu_custom_call.1']
  %s0 = inlined_call_operand.vmem [shape: f32[128,16], index: 0, kind: input, shape index: {}]
  %s1 = inlined_call_operand.vmem [shape: f32[128,4], index: 1, kind: input, shape index: {}]
  %s2 = inlined_call_operand.vmem [shape: f32[16,32], index: 2, kind: input, shape index: {}]
  %s3 = inlined_call_operand.vmem [shape: f32[4,32], index: 3, kind: input, shape index: {}]
  %s4 = inlined_call_operand.vmem [shape: f32[1,32], index: 4, kind: input, shape index: {}]
  %s5 = inlined_call_operand.vmem [shape: f32[32,32], index: 5, kind: input, shape index: {}]
  %s6 = inlined_call_operand.vmem [shape: f32[1,32], index: 6, kind: input, shape index: {}]
  %s7 = inlined_call_operand.vmem [shape: f32[1,32], index: 7, kind: input, shape index: {}]
  %s8 = inlined_call_operand.<no memory space> [shape: f32[1,1], index: 8, kind: input, shape index: {}]
  %s9 = inlined_call_operand.vmem [shape: f32[128,1], index: 9, kind: output, shape index: {}]
  %s10 = sld [smem:[#allocation0]]
  $region46: #{tpu_custom_call.1} parent=0
    _
  %s12 = ssub.s32 1, %s10
  %s13 = scalar_select 0, %s12, %s10
  %v14 = vstv %s8
  %15 = vst [vmem:[#allocation2] sm:$0x1] %v14
  // Predicated region
  $region2: #{tpu_custom_call.1} parent=0 // pred_check
    _
  $region3: #{tpu_custom_call.1} parent=0 // pred_check_branch
    %17 = sbr.rel (0) target = $region5
  $region4: #{tpu_custom_call.1} parent=0 // pred_region
    _
  $region5: #{tpu_custom_call.1} parent=0 // pred_fallthru
    _
  // Predicated region
  $region6: #{tpu_custom_call.1} parent=0 // pred_check
    _
  $region7: #{tpu_custom_call.1} parent=0 // pred_check_branch
    %19 = sbr.rel (0) target = $region9
  $region8: #{tpu_custom_call.1} parent=0 // pred_region
    _
  $region9: #{tpu_custom_call.1} parent=0 // pred_fallthru
    _
  // Predicated region
  $region10: #{tpu_custom_call.1} parent=0 // pred_check
    _
  $region11: #{tpu_custom_call.1} parent=0 // pred_check_branch
    %21 = sbr.rel (0) target = $region13
  $region12: #{tpu_custom_call.1} parent=0 // pred_region
    _
  $region13: #{tpu_custom_call.1} parent=0 // pred_fallthru
    _
  // Predicated region
  $region14: #{tpu_custom_call.1} parent=0 // pred_check
    _
  $region15: #{tpu_custom_call.1} parent=0 // pred_check_branch
    %23 = sbr.rel (0) target = $region17
  $region16: #{tpu_custom_call.1} parent=0 // pred_region
    _
  $region17: #{tpu_custom_call.1} parent=0 // pred_fallthru
    _
  // Predicated region
  $region18: #{tpu_custom_call.1} parent=0 // pred_check
    _
  $region19: #{tpu_custom_call.1} parent=0 // pred_check_branch
    %25 = sbr.rel (0) target = $region21
  $region20: #{tpu_custom_call.1} parent=0 // pred_region
    _
  $region21: #{tpu_custom_call.1} parent=0 // pred_fallthru
    _
  // Predicated region
  $region22: #{tpu_custom_call.1} parent=0 // pred_check
    _
  $region23: #{tpu_custom_call.1} parent=0 // pred_check_branch
    %27 = sbr.rel (0) target = $region25
  $region24: #{tpu_custom_call.1} parent=0 // pred_region
    _
  $region25: #{tpu_custom_call.1} parent=0 // pred_fallthru
    _
  // Predicated region
  $region26: #{tpu_custom_call.1} parent=0 // pred_check
    _
  $region27: #{tpu_custom_call.1} parent=0 // pred_check_branch
    %29 = sbr.rel (0) target = $region29
  $region28: #{tpu_custom_call.1} parent=0 // pred_region
    _
  $region29: #{tpu_custom_call.1} parent=0 // pred_fallthru
    _
  // Predicated region
  $region30: #{tpu_custom_call.1} parent=0 // pred_check
    _
  $region31: #{tpu_custom_call.1} parent=0 // pred_check_branch
    %31 = sbr.rel (0) target = $region33
  $region32: #{tpu_custom_call.1} parent=0 // pred_region
    _
  $region33: #{tpu_custom_call.1} parent=0 // pred_fallthru
    _
  // Predicated region
  $region34: #{tpu_custom_call.1} parent=0 // pred_check
    _
  $region35: #{tpu_custom_call.1} parent=0 // pred_check_branch
    %33 = sbr.rel (0) target = $region37
  $region36: #{tpu_custom_call.1} parent=0 // pred_region
    _
  $region37: #{tpu_custom_call.1} parent=0 // pred_fallthru
    _
  %v34 = vld [vmem:[%s0] sm:$0xff]
  %v35 = vld [vmem:[%s0 + $0x8] sm:$0xff]
  %v36 = vld [vmem:[%s0 + $0x10] sm:$0xff]
  %v37 = vld [vmem:[%s0 + $0x18] sm:$0xff]
  %v38 = vld [vmem:[%s0 + $0x20] sm:$0xff]
  %v39 = vld [vmem:[%s0 + $0x28] sm:$0xff]
  %v40 = vld [vmem:[%s0 + $0x30] sm:$0xff]
  %v41 = vld [vmem:[%s0 + $0x38] sm:$0xff]
  %v42 = vld [vmem:[%s0 + $0x40] sm:$0xff]
  %v43 = vld [vmem:[%s0 + $0x48] sm:$0xff]
  %v44 = vld [vmem:[%s0 + $0x50] sm:$0xff]
  %v45 = vld [vmem:[%s0 + $0x58] sm:$0xff]
  %v46 = vld [vmem:[%s0 + $0x60] sm:$0xff]
  %v47 = vld [vmem:[%s0 + $0x68] sm:$0xff]
  %v48 = vld [vmem:[%s0 + $0x70] sm:$0xff]
  %v49 = vld [vmem:[%s0 + $0x78] sm:$0xff]
  %v50 = vld [vmem:[%s2] sm:$0xff]
  %v51 = vld [vmem:[%s2 + $0x8] sm:$0xff]
  %v52 = vld [vmem:[%s1] sm:$0xff]
  %v53 = vld [vmem:[%s1 + $0x8] sm:$0xff]
  %v54 = vld [vmem:[%s1 + $0x10] sm:$0xff]
  %v55 = vld [vmem:[%s1 + $0x18] sm:$0xff]
  %v56 = vld [vmem:[%s1 + $0x20] sm:$0xff]
  %v57 = vld [vmem:[%s1 + $0x28] sm:$0xff]
  %v58 = vld [vmem:[%s1 + $0x30] sm:$0xff]
  %v59 = vld [vmem:[%s1 + $0x38] sm:$0xff]
  %v60 = vld [vmem:[%s1 + $0x40] sm:$0xff]
  %v61 = vld [vmem:[%s1 + $0x48] sm:$0xff]
  %v62 = vld [vmem:[%s1 + $0x50] sm:$0xff]
  %v63 = vld [vmem:[%s1 + $0x58] sm:$0xff]
  %v64 = vld [vmem:[%s1 + $0x60] sm:$0xff]
  %v65 = vld [vmem:[%s1 + $0x68] sm:$0xff]
  %v66 = vld [vmem:[%s1 + $0x70] sm:$0xff]
  %v67 = vld [vmem:[%s1 + $0x78] sm:$0xff]
  %v68 = vld [vmem:[%s3] sm:$0xf]
  %vm69 = vcmask 31744
  %v71 = vsel %vm69, %v52, 0
  %v74 = vsel %vm69, %v53, 0
  %v77 = vsel %vm69, %v54, 0
  %v80 = vsel %vm69, %v55, 0
  %v83 = vsel %vm69, %v56, 0
  %v86 = vsel %vm69, %v57, 0
  %v89 = vsel %vm69, %v58, 0
  %v92 = vsel %vm69, %v59, 0
  %v95 = vsel %vm69, %v60, 0
  %v98 = vsel %vm69, %v61, 0
  %v101 = vsel %vm69, %v62, 0
  %v104 = vsel %vm69, %v63, 0
  %v107 = vsel %vm69, %v64, 0
  %v110 = vsel %vm69, %v65, 0
  %v113 = vsel %vm69, %v66, 0
  %v116 = vsel %vm69, %v67, 0
  %vm118 = vcmask 1043456
  %v120 = vsel %vm118, %v68, 0
  %122 = vmatprep.subr.mxu0 0.0
  %123 = vmatpush1.msra.mxu0 %v120
  %124 = vmatprep.subr.mxu0 0.0
  %125 = vmatpush1.msra.mxu0 0.0
  %126 = vmatprep.subr.mxu0 0.0
  %127 = vmatpush1.msra.mxu0 0.0
  %128 = vmatprep.subr.mxu0 0.0
  %129 = vmatpush1.msra.mxu0 0.0
  %130 = vmatprep.subr.mxu0 0.0
  %131 = vmatpush1.msra.mxu0 0.0
  %132 = vmatprep.subr.mxu0 0.0
  %133 = vmatpush1.msra.mxu0 0.0
  %134 = vmatprep.subr.mxu0 0.0
  %135 = vmatpush1.msra.mxu0 0.0
  %136 = vmatprep.subr.mxu0 0.0
  %137 = vmatpush1.msra.mxu0 0.0
  %138 = vmatprep.subr.mxu0 0.0
  %139 = vmatpush1.msra.mxu0 0.0
  %140 = vmatprep.subr.mxu0 0.0
  %141 = vmatpush1.msra.mxu0 0.0
  %142 = vmatprep.subr.mxu0 0.0
  %143 = vmatpush1.msra.mxu0 0.0
  %144 = vmatprep.subr.mxu0 0.0
  %145 = vmatpush1.msra.mxu0 0.0
  %146 = vmatprep.subr.mxu0 0.0
  %147 = vmatpush1.msra.mxu0 0.0
  %148 = vmatprep.subr.mxu0 0.0
  %149 = vmatpush1.msra.mxu0 0.0
  %150 = vmatprep.subr.mxu0 0.0
  %151 = vmatpush1.msra.mxu0 0.0
  %152 = vmatprep.subr.mxu0 0.0
  %153 = vmatpush1.msra.mxu0 0.0
  %154 = vmatprep.subr.mxu0 0.0
  %155 = vmatpush1.msra.mxu0 0.0
  %156 = vmatprep.subr.mxu0 0.0
  %157 = vmatpush1.msra.mxu0 0.0
  %158 = vmatprep.subr.mxu0 0.0
  %159 = vmatpush1.msra.mxu0 0.0
  %160 = vmatprep.subr.mxu0 0.0
  %161 = vmatpush1.msra.mxu0 0.0
  %162 = vmatprep.subr.mxu0 0.0
  %163 = vmatpush1.msra.mxu0 0.0
  %164 = vmatprep.subr.mxu0 0.0
  %165 = vmatpush1.msra.mxu0 0.0
  %166 = vmatprep.subr.mxu0 0.0
  %167 = vmatpush1.msra.mxu0 0.0
  %168 = vmatprep.subr.mxu0 0.0
  %169 = vmatpush1.msra.mxu0 0.0
  %170 = vmatprep.subr.mxu0 0.0
  %171 = vmatpush1.msra.mxu0 0.0
  %172 = vmatprep.subr.mxu0 0.0
  %173 = vmatpush1.msra.mxu0 0.0
  %174 = vmatprep.subr.mxu0 0.0
  %175 = vmatpush1.msra.mxu0 0.0
  %176 = vmatprep.subr.mxu0 0.0
  %177 = vmatpush1.msra.mxu0 0.0
  %178 = vmatprep.subr.mxu0 0.0
  %179 = vmatpush1.msra.mxu0 0.0
  %180 = vmatprep.subr.mxu0 0.0
  %181 = vmatpush1.msra.mxu0 0.0
  %182 = vmatprep.subr.mxu0 0.0
  %183 = vmatpush1.msra.mxu0 0.0
  %184 = vmatprep.subr.mxu0 0.0
  %185 = vmatpush1.msra.mxu0 0.0
  %186 = vmatprep.mubr.f32.mxu0 0.0
  %187 = vmatmul.mubr.f32.gmra.mrb[0].mxu0 %v71
  %v188 = vpop.f32.mrb[0].mxu0
  %v189 = vadd.f32 0.0, %v188
  %v190 = vpop.f32.mrb[0].mxu0
  %191 = vmatprep.mubr.f32.mxu0 0.0
  %192 = vmatmul.mubr.f32.gmra.mrb[0].mxu0 %v74
  %v193 = vpop.f32.mrb[0].mxu0
  %v194 = vadd.f32 0.0, %v193
  %v195 = vpop.f32.mrb[0].mxu0
  %196 = vmatprep.mubr.f32.mxu0 0.0
  %197 = vmatmul.mubr.f32.gmra.mrb[0].mxu0 %v77
  %v198 = vpop.f32.mrb[0].mxu0
  %v199 = vadd.f32 0.0, %v198
  %v200 = vpop.f32.mrb[0].mxu0
  %201 = vmatprep.mubr.f32.mxu0 0.0
  %202 = vmatmul.mubr.f32.gmra.mrb[0].mxu0 %v80
  %v203 = vpop.f32.mrb[0].mxu0
  %v204 = vadd.f32 0.0, %v203
  %v205 = vpop.f32.mrb[0].mxu0
  %206 = vmatprep.mubr.f32.mxu0 0.0
  %207 = vmatmul.mubr.f32.gmra.mrb[0].mxu0 %v83
  %v208 = vpop.f32.mrb[0].mxu0
  %v209 = vadd.f32 0.0, %v208
  %v210 = vpop.f32.mrb[0].mxu0
  %211 = vmatprep.mubr.f32.mxu0 0.0
  %212 = vmatmul.mubr.f32.gmra.mrb[0].mxu0 %v86
  %v213 = vpop.f32.mrb[0].mxu0
  %v214 = vadd.f32 0.0, %v213
  %v215 = vpop.f32.mrb[0].mxu0
  %216 = vmatprep.mubr.f32.mxu0 0.0
  %217 = vmatmul.mubr.f32.gmra.mrb[0].mxu0 %v89
  %v218 = vpop.f32.mrb[0].mxu0
  %v219 = vadd.f32 0.0, %v218
  %v220 = vpop.f32.mrb[0].mxu0
  %221 = vmatprep.mubr.f32.mxu0 0.0
  %222 = vmatmul.mubr.f32.gmra.mrb[0].mxu0 %v92
  %v223 = vpop.f32.mrb[0].mxu0
  %v224 = vadd.f32 0.0, %v223
  %v225 = vpop.f32.mrb[0].mxu0
  %226 = vmatprep.mubr.f32.mxu0 0.0
  %227 = vmatmul.mubr.f32.gmra.mrb[0].mxu0 %v95
  %v228 = vpop.f32.mrb[0].mxu0
  %v229 = vadd.f32 0.0, %v228
  %v230 = vpop.f32.mrb[0].mxu0
  %231 = vmatprep.mubr.f32.mxu0 0.0
  %232 = vmatmul.mubr.f32.gmra.mrb[0].mxu0 %v98
  %v233 = vpop.f32.mrb[0].mxu0
  %v234 = vadd.f32 0.0, %v233
  %v235 = vpop.f32.mrb[0].mxu0
  %236 = vmatprep.mubr.f32.mxu0 0.0
  %237 = vmatmul.mubr.f32.gmra.mrb[0].mxu0 %v101
  %v238 = vpop.f32.mrb[0].mxu0
  %v239 = vadd.f32 0.0, %v238
  %v240 = vpop.f32.mrb[0].mxu0
  %241 = vmatprep.mubr.f32.mxu0 0.0
  %242 = vmatmul.mubr.f32.gmra.mrb[0].mxu0 %v104
  %v243 = vpop.f32.mrb[0].mxu0
  %v244 = vadd.f32 0.0, %v243
  %v245 = vpop.f32.mrb[0].mxu0
  %246 = vmatprep.mubr.f32.mxu0 0.0
  %247 = vmatmul.mubr.f32.gmra.mrb[0].mxu0 %v107
  %v248 = vpop.f32.mrb[0].mxu0
  %v249 = vadd.f32 0.0, %v248
  %v250 = vpop.f32.mrb[0].mxu0
  %251 = vmatprep.mubr.f32.mxu0 0.0
  %252 = vmatmul.mubr.f32.gmra.mrb[0].mxu0 %v110
  %v253 = vpop.f32.mrb[0].mxu0
  %v254 = vadd.f32 0.0, %v253
  %v255 = vpop.f32.mrb[0].mxu0
  %256 = vmatprep.mubr.f32.mxu0 0.0
  %257 = vmatmul.mubr.f32.gmra.mrb[0].mxu0 %v113
  %v258 = vpop.f32.mrb[0].mxu0
  %v259 = vadd.f32 0.0, %v258
  %v260 = vpop.f32.mrb[0].mxu0
  %261 = vmatprep.mubr.f32.mxu0 0.0
  %262 = vmatmul.mubr.f32.gmra.mrb[0].mxu0 %v116
  %v263 = vpop.f32.mrb[0].mxu0
  %v264 = vadd.f32 0.0, %v263
  %v265 = vpop.f32.mrb[0].mxu0
  %266 = vdwg.mxu0
  %vm267 = vcmask 130048
  %v269 = vsel %vm267, %v34, 0
  %v272 = vsel %vm267, %v35, 0
  %v275 = vsel %vm267, %v36, 0
  %v278 = vsel %vm267, %v37, 0
  %v281 = vsel %vm267, %v38, 0
  %v284 = vsel %vm267, %v39, 0
  %v287 = vsel %vm267, %v40, 0
  %v290 = vsel %vm267, %v41, 0
  %v293 = vsel %vm267, %v42, 0
  %v296 = vsel %vm267, %v43, 0
  %v299 = vsel %vm267, %v44, 0
  %v302 = vsel %vm267, %v45, 0
  %v305 = vsel %vm267, %v46, 0
  %v308 = vsel %vm267, %v47, 0
  %v311 = vsel %vm267, %v48, 0
  %v314 = vsel %vm267, %v49, 0
  %316 = vmatprep.subr.mxu0 0.0
  %317 = vmatpush1.msra.mxu0 %v50
  %318 = vmatprep.subr.mxu0 0.0
  %319 = vmatpush1.msra.mxu0 %v51
  %320 = vmatprep.subr.mxu0 0.0
  %321 = vmatpush1.msra.mxu0 0.0
  %322 = vmatprep.subr.mxu0 0.0
  %323 = vmatpush1.msra.mxu0 0.0
  %324 = vmatprep.subr.mxu0 0.0
  %325 = vmatpush1.msra.mxu0 0.0
  %326 = vmatprep.subr.mxu0 0.0
  %327 = vmatpush1.msra.mxu0 0.0
  %328 = vmatprep.subr.mxu0 0.0
  %329 = vmatpush1.msra.mxu0 0.0
  %330 = vmatprep.subr.mxu0 0.0
  %331 = vmatpush1.msra.mxu0 0.0
  %332 = vmatprep.subr.mxu0 0.0
  %333 = vmatpush1.msra.mxu0 0.0
  %334 = vmatprep.subr.mxu0 0.0
  %335 = vmatpush1.msra.mxu0 0.0
  %336 = vmatprep.subr.mxu0 0.0
  %337 = vmatpush1.msra.mxu0 0.0
  %338 = vmatprep.subr.mxu0 0.0
  %339 = vmatpush1.msra.mxu0 0.0
  %340 = vmatprep.subr.mxu0 0.0
  %341 = vmatpush1.msra.mxu0 0.0
  %342 = vmatprep.subr.mxu0 0.0
  %343 = vmatpush1.msra.mxu0 0.0
  %344 = vmatprep.subr.mxu0 0.0
  %345 = vmatpush1.msra.mxu0 0.0
  %346 = vmatprep.subr.mxu0 0.0
  %347 = vmatpush1.msra.mxu0 0.0
  %348 = vmatprep.subr.mxu0 0.0
  %349 = vmatpush1.msra.mxu0 0.0
  %350 = vmatprep.subr.mxu0 0.0
  %351 = vmatpush1.msra.mxu0 0.0
  %352 = vmatprep.subr.mxu0 0.0
  %353 = vmatpush1.msra.mxu0 0.0
  %354 = vmatprep.subr.mxu0 0.0
  %355 = vmatpush1.msra.mxu0 0.0
  %356 = vmatprep.subr.mxu0 0.0
  %357 = vmatpush1.msra.mxu0 0.0
  %358 = vmatprep.subr.mxu0 0.0
  %359 = vmatpush1.msra.mxu0 0.0
  %360 = vmatprep.subr.mxu0 0.0
  %361 = vmatpush1.msra.mxu0 0.0
  %362 = vmatprep.subr.mxu0 0.0
  %363 = vmatpush1.msra.mxu0 0.0
  %364 = vmatprep.subr.mxu0 0.0
  %365 = vmatpush1.msra.mxu0 0.0
  %366 = vmatprep.subr.mxu0 0.0
  %367 = vmatpush1.msra.mxu0 0.0
  %368 = vmatprep.subr.mxu0 0.0
  %369 = vmatpush1.msra.mxu0 0.0
  %370 = vmatprep.subr.mxu0 0.0
  %371 = vmatpush1.msra.mxu0 0.0
  %372 = vmatprep.subr.mxu0 0.0
  %373 = vmatpush1.msra.mxu0 0.0
  %374 = vmatprep.subr.mxu0 0.0
  %375 = vmatpush1.msra.mxu0 0.0
  %376 = vmatprep.subr.mxu0 0.0
  %377 = vmatpush1.msra.mxu0 0.0
  %378 = vmatprep.subr.mxu0 0.0
  %379 = vmatpush1.msra.mxu0 0.0
  %380 = vmatprep.mubr.f32.mxu0 0.0
  %381 = vmatmul.mubr.f32.gmra.mrb[0].mxu0 %v269
  %v382 = vpop.f32.mrb[0].mxu0
  %v383 = vadd.f32 %v189, %v382
  %v384 = vpop.f32.mrb[0].mxu0
  %385 = vmatprep.mubr.f32.mxu0 0.0
  %386 = vmatmul.mubr.f32.gmra.mrb[0].mxu0 %v272
  %v387 = vpop.f32.mrb[0].mxu0
  %v388 = vadd.f32 %v194, %v387
  %v389 = vpop.f32.mrb[0].mxu0
  %390 = vmatprep.mubr.f32.mxu0 0.0
  %391 = vmatmul.mubr.f32.gmra.mrb[0].mxu0 %v275
  %v392 = vpop.f32.mrb[0].mxu0
  %v393 = vadd.f32 %v199, %v392
  %v394 = vpop.f32.mrb[0].mxu0
  %395 = vmatprep.mubr.f32.mxu0 0.0
  %396 = vmatmul.mubr.f32.gmra.mrb[0].mxu0 %v278
  %v397 = vpop.f32.mrb[0].mxu0
  %v398 = vadd.f32 %v204, %v397
  %v399 = vpop.f32.mrb[0].mxu0
  %400 = vmatprep.mubr.f32.mxu0 0.0
  %401 = vmatmul.mubr.f32.gmra.mrb[0].mxu0 %v281
  %v402 = vpop.f32.mrb[0].mxu0
  %v403 = vadd.f32 %v209, %v402
  %v404 = vpop.f32.mrb[0].mxu0
  %405 = vmatprep.mubr.f32.mxu0 0.0
  %406 = vmatmul.mubr.f32.gmra.mrb[0].mxu0 %v284
  %v407 = vpop.f32.mrb[0].mxu0
  %v408 = vadd.f32 %v214, %v407
  %v409 = vpop.f32.mrb[0].mxu0
  %410 = vmatprep.mubr.f32.mxu0 0.0
  %411 = vmatmul.mubr.f32.gmra.mrb[0].mxu0 %v287
  %v412 = vpop.f32.mrb[0].mxu0
  %v413 = vadd.f32 %v219, %v412
  %v414 = vpop.f32.mrb[0].mxu0
  %415 = vmatprep.mubr.f32.mxu0 0.0
  %416 = vmatmul.mubr.f32.gmra.mrb[0].mxu0 %v290
  %v417 = vpop.f32.mrb[0].mxu0
  %v418 = vadd.f32 %v224, %v417
  %v419 = vpop.f32.mrb[0].mxu0
  %420 = vmatprep.mubr.f32.mxu0 0.0
  %421 = vmatmul.mubr.f32.gmra.mrb[0].mxu0 %v293
  %v422 = vpop.f32.mrb[0].mxu0
  %v423 = vadd.f32 %v229, %v422
  %v424 = vpop.f32.mrb[0].mxu0
  %425 = vmatprep.mubr.f32.mxu0 0.0
  %426 = vmatmul.mubr.f32.gmra.mrb[0].mxu0 %v296
  %v427 = vpop.f32.mrb[0].mxu0
  %v428 = vadd.f32 %v234, %v427
  %v429 = vpop.f32.mrb[0].mxu0
  %430 = vmatprep.mubr.f32.mxu0 0.0
  %431 = vmatmul.mubr.f32.gmra.mrb[0].mxu0 %v299
  %v432 = vpop.f32.mrb[0].mxu0
  %v433 = vadd.f32 %v239, %v432
  %v434 = vpop.f32.mrb[0].mxu0
  %435 = vmatprep.mubr.f32.mxu0 0.0
  %436 = vmatmul.mubr.f32.gmra.mrb[0].mxu0 %v302
  %v437 = vpop.f32.mrb[0].mxu0
  %v438 = vadd.f32 %v244, %v437
  %v439 = vpop.f32.mrb[0].mxu0
  %440 = vmatprep.mubr.f32.mxu0 0.0
  %441 = vmatmul.mubr.f32.gmra.mrb[0].mxu0 %v305
  %v442 = vpop.f32.mrb[0].mxu0
  %v443 = vadd.f32 %v249, %v442
  %v444 = vpop.f32.mrb[0].mxu0
  %445 = vmatprep.mubr.f32.mxu0 0.0
  %446 = vmatmul.mubr.f32.gmra.mrb[0].mxu0 %v308
  %v447 = vpop.f32.mrb[0].mxu0
  %v448 = vadd.f32 %v254, %v447
  %v449 = vpop.f32.mrb[0].mxu0
  %450 = vmatprep.mubr.f32.mxu0 0.0
  %451 = vmatmul.mubr.f32.gmra.mrb[0].mxu0 %v311
  %v452 = vpop.f32.mrb[0].mxu0
  %v453 = vadd.f32 %v259, %v452
  %v454 = vpop.f32.mrb[0].mxu0
  %455 = vmatprep.mubr.f32.mxu0 0.0
  %456 = vmatmul.mubr.f32.gmra.mrb[0].mxu0 %v314
  %v457 = vpop.f32.mrb[0].mxu0
  %v458 = vadd.f32 %v264, %v457
  %v459 = vpop.f32.mrb[0].mxu0
  %460 = vdwg.mxu0
  %v461 = vld [vmem:[%s4] sm:$0x1]
  %v463 = vlaneseq
  %v464 = vshrl.u32 %v463, 7
  %v465 = vsub.s32 0, %v464
  %v466 = vrot.slane %v461, %v465
  %v468 = vadd.f32 %v383, %v466
  %v469 = vadd.f32 %v388, %v466
  %v470 = vadd.f32 %v393, %v466
  %v471 = vadd.f32 %v398, %v466
  %v472 = vadd.f32 %v403, %v466
  %v473 = vadd.f32 %v408, %v466
  %v474 = vadd.f32 %v413, %v466
  %v475 = vadd.f32 %v418, %v466
  %v476 = vadd.f32 %v423, %v466
  %v477 = vadd.f32 %v428, %v466
  %v478 = vadd.f32 %v433, %v466
  %v479 = vadd.f32 %v438, %v466
  %v480 = vadd.f32 %v443, %v466
  %v481 = vadd.f32 %v448, %v466
  %v482 = vadd.f32 %v453, %v466
  %v483 = vadd.f32 %v458, %v466
  %v484 = vmax.f32 %v468, 0.0
  %v485 = vmax.f32 %v469, 0.0
  %v486 = vmax.f32 %v470, 0.0
  %v487 = vmax.f32 %v471, 0.0
  %v488 = vmax.f32 %v472, 0.0
  %v489 = vmax.f32 %v473, 0.0
  %v490 = vmax.f32 %v474, 0.0
  %v491 = vmax.f32 %v475, 0.0
  %v492 = vmax.f32 %v476, 0.0
  %v493 = vmax.f32 %v477, 0.0
  %v494 = vmax.f32 %v478, 0.0
  %v495 = vmax.f32 %v479, 0.0
  %v496 = vmax.f32 %v480, 0.0
  %v497 = vmax.f32 %v481, 0.0
  %v498 = vmax.f32 %v482, 0.0
  %v499 = vmax.f32 %v483, 0.0
  %v500 = vld [vmem:[%s5] sm:$0xff]
  %v501 = vld [vmem:[%s5 + $0x8] sm:$0xff]
  %v502 = vld [vmem:[%s5 + $0x10] sm:$0xff]
  %v503 = vld [vmem:[%s5 + $0x18] sm:$0xff]
  %v504 = vld [vmem:[%s6] sm:$0x1]
  %v506 = vlaneseq
  %v507 = vshrl.u32 %v506, 7
  %v508 = vsub.s32 0, %v507
  %v509 = vrot.slane %v504, %v508
  %vm511 = vcmask 261120
  %v513 = vsel %vm511, %v484, 0
  %v516 = vsel %vm511, %v485, 0
  %v519 = vsel %vm511, %v486, 0
  %v522 = vsel %vm511, %v487, 0
  %v525 = vsel %vm511, %v488, 0
  %v528 = vsel %vm511, %v489, 0
  %v531 = vsel %vm511, %v490, 0
  %v534 = vsel %vm511, %v491, 0
  %v537 = vsel %vm511, %v492, 0
  %v540 = vsel %vm511, %v493, 0
  %v543 = vsel %vm511, %v494, 0
  %v546 = vsel %vm511, %v495, 0
  %v549 = vsel %vm511, %v496, 0
  %v552 = vsel %vm511, %v497, 0
  %v555 = vsel %vm511, %v498, 0
  %v558 = vsel %vm511, %v499, 0
  %560 = vmatprep.subr.mxu0 0.0
  %561 = vmatpush1.msra.mxu0 %v500
  %562 = vmatprep.subr.mxu0 0.0
  %563 = vmatpush1.msra.mxu0 %v501
  %564 = vmatprep.subr.mxu0 0.0
  %565 = vmatpush1.msra.mxu0 %v502
  %566 = vmatprep.subr.mxu0 0.0
  %567 = vmatpush1.msra.mxu0 %v503
  %568 = vmatprep.subr.mxu0 0.0
  %569 = vmatpush1.msra.mxu0 0.0
  %570 = vmatprep.subr.mxu0 0.0
  %571 = vmatpush1.msra.mxu0 0.0
  %572 = vmatprep.subr.mxu0 0.0
  %573 = vmatpush1.msra.mxu0 0.0
  %574 = vmatprep.subr.mxu0 0.0
  %575 = vmatpush1.msra.mxu0 0.0
  %576 = vmatprep.subr.mxu0 0.0
  %577 = vmatpush1.msra.mxu0 0.0
  %578 = vmatprep.subr.mxu0 0.0
  %579 = vmatpush1.msra.mxu0 0.0
  %580 = vmatprep.subr.mxu0 0.0
  %581 = vmatpush1.msra.mxu0 0.0
  %582 = vmatprep.subr.mxu0 0.0
  %583 = vmatpush1.msra.mxu0 0.0
  %584 = vmatprep.subr.mxu0 0.0
  %585 = vmatpush1.msra.mxu0 0.0
  %586 = vmatprep.subr.mxu0 0.0
  %587 = vmatpush1.msra.mxu0 0.0
  %588 = vmatprep.subr.mxu0 0.0
  %589 = vmatpush1.msra.mxu0 0.0
  %590 = vmatprep.subr.mxu0 0.0
  %591 = vmatpush1.msra.mxu0 0.0
  %592 = vmatprep.subr.mxu0 0.0
  %593 = vmatpush1.msra.mxu0 0.0
  %594 = vmatprep.subr.mxu0 0.0
  %595 = vmatpush1.msra.mxu0 0.0
  %596 = vmatprep.subr.mxu0 0.0
  %597 = vmatpush1.msra.mxu0 0.0
  %598 = vmatprep.subr.mxu0 0.0
  %599 = vmatpush1.msra.mxu0 0.0
  %600 = vmatprep.subr.mxu0 0.0
  %601 = vmatpush1.msra.mxu0 0.0
  %602 = vmatprep.subr.mxu0 0.0
  %603 = vmatpush1.msra.mxu0 0.0
  %604 = vmatprep.subr.mxu0 0.0
  %605 = vmatpush1.msra.mxu0 0.0
  %606 = vmatprep.subr.mxu0 0.0
  %607 = vmatpush1.msra.mxu0 0.0
  %608 = vmatprep.subr.mxu0 0.0
  %609 = vmatpush1.msra.mxu0 0.0
  %610 = vmatprep.subr.mxu0 0.0
  %611 = vmatpush1.msra.mxu0 0.0
  %612 = vmatprep.subr.mxu0 0.0
  %613 = vmatpush1.msra.mxu0 0.0
  %614 = vmatprep.subr.mxu0 0.0
  %615 = vmatpush1.msra.mxu0 0.0
  %616 = vmatprep.subr.mxu0 0.0
  %617 = vmatpush1.msra.mxu0 0.0
  %618 = vmatprep.subr.mxu0 0.0
  %619 = vmatpush1.msra.mxu0 0.0
  %620 = vmatprep.subr.mxu0 0.0
  %621 = vmatpush1.msra.mxu0 0.0
  %622 = vmatprep.subr.mxu0 0.0
  %623 = vmatpush1.msra.mxu0 0.0
  %624 = vmatprep.mubr.f32.mxu0 0.0
  %625 = vmatmul.mubr.f32.gmra.mrb[0].mxu0 %v513
  %v626 = vpop.f32.mrb[0].mxu0
  %v627 = vadd.f32 %v509, %v626
  %v628 = vpop.f32.mrb[0].mxu0
  %629 = vmatprep.mubr.f32.mxu0 0.0
  %630 = vmatmul.mubr.f32.gmra.mrb[0].mxu0 %v516
  %v631 = vpop.f32.mrb[0].mxu0
  %v632 = vadd.f32 %v509, %v631
  %v633 = vpop.f32.mrb[0].mxu0
  %634 = vmatprep.mubr.f32.mxu0 0.0
  %635 = vmatmul.mubr.f32.gmra.mrb[0].mxu0 %v519
  %v636 = vpop.f32.mrb[0].mxu0
  %v637 = vadd.f32 %v509, %v636
  %v638 = vpop.f32.mrb[0].mxu0
  %639 = vmatprep.mubr.f32.mxu0 0.0
  %640 = vmatmul.mubr.f32.gmra.mrb[0].mxu0 %v522
  %v641 = vpop.f32.mrb[0].mxu0
  %v642 = vadd.f32 %v509, %v641
  %v643 = vpop.f32.mrb[0].mxu0
  %644 = vmatprep.mubr.f32.mxu0 0.0
  %645 = vmatmul.mubr.f32.gmra.mrb[0].mxu0 %v525
  %v646 = vpop.f32.mrb[0].mxu0
  %v647 = vadd.f32 %v509, %v646
  %v648 = vpop.f32.mrb[0].mxu0
  %649 = vmatprep.mubr.f32.mxu0 0.0
  %650 = vmatmul.mubr.f32.gmra.mrb[0].mxu0 %v528
  %v651 = vpop.f32.mrb[0].mxu0
  %v652 = vadd.f32 %v509, %v651
  %v653 = vpop.f32.mrb[0].mxu0
  %654 = vmatprep.mubr.f32.mxu0 0.0
  %655 = vmatmul.mubr.f32.gmra.mrb[0].mxu0 %v531
  %v656 = vpop.f32.mrb[0].mxu0
  %v657 = vadd.f32 %v509, %v656
  %v658 = vpop.f32.mrb[0].mxu0
  %659 = vmatprep.mubr.f32.mxu0 0.0
  %660 = vmatmul.mubr.f32.gmra.mrb[0].mxu0 %v534
  %v661 = vpop.f32.mrb[0].mxu0
  %v662 = vadd.f32 %v509, %v661
  %v663 = vpop.f32.mrb[0].mxu0
  %664 = vmatprep.mubr.f32.mxu0 0.0
  %665 = vmatmul.mubr.f32.gmra.mrb[0].mxu0 %v537
  %v666 = vpop.f32.mrb[0].mxu0
  %v667 = vadd.f32 %v509, %v666
  %v668 = vpop.f32.mrb[0].mxu0
  %669 = vmatprep.mubr.f32.mxu0 0.0
  %670 = vmatmul.mubr.f32.gmra.mrb[0].mxu0 %v540
  %v671 = vpop.f32.mrb[0].mxu0
  %v672 = vadd.f32 %v509, %v671
  %v673 = vpop.f32.mrb[0].mxu0
  %674 = vmatprep.mubr.f32.mxu0 0.0
  %675 = vmatmul.mubr.f32.gmra.mrb[0].mxu0 %v543
  %v676 = vpop.f32.mrb[0].mxu0
  %v677 = vadd.f32 %v509, %v676
  %v678 = vpop.f32.mrb[0].mxu0
  %679 = vmatprep.mubr.f32.mxu0 0.0
  %680 = vmatmul.mubr.f32.gmra.mrb[0].mxu0 %v546
  %v681 = vpop.f32.mrb[0].mxu0
  %v682 = vadd.f32 %v509, %v681
  %v683 = vpop.f32.mrb[0].mxu0
  %684 = vmatprep.mubr.f32.mxu0 0.0
  %685 = vmatmul.mubr.f32.gmra.mrb[0].mxu0 %v549
  %v686 = vpop.f32.mrb[0].mxu0
  %v687 = vadd.f32 %v509, %v686
  %v688 = vpop.f32.mrb[0].mxu0
  %689 = vmatprep.mubr.f32.mxu0 0.0
  %690 = vmatmul.mubr.f32.gmra.mrb[0].mxu0 %v552
  %v691 = vpop.f32.mrb[0].mxu0
  %v692 = vadd.f32 %v509, %v691
  %v693 = vpop.f32.mrb[0].mxu0
  %694 = vmatprep.mubr.f32.mxu0 0.0
  %695 = vmatmul.mubr.f32.gmra.mrb[0].mxu0 %v555
  %v696 = vpop.f32.mrb[0].mxu0
  %v697 = vadd.f32 %v509, %v696
  %v698 = vpop.f32.mrb[0].mxu0
  %699 = vmatprep.mubr.f32.mxu0 0.0
  %700 = vmatmul.mubr.f32.gmra.mrb[0].mxu0 %v558
  %v701 = vpop.f32.mrb[0].mxu0
  %v702 = vadd.f32 %v509, %v701
  %v703 = vpop.f32.mrb[0].mxu0
  %704 = vdwg.mxu0
  %v705 = vmax.f32 %v627, 0.0
  %v706 = vmax.f32 %v632, 0.0
  %v707 = vmax.f32 %v637, 0.0
  %v708 = vmax.f32 %v642, 0.0
  %v709 = vmax.f32 %v647, 0.0
  %v710 = vmax.f32 %v652, 0.0
  %v711 = vmax.f32 %v657, 0.0
  %v712 = vmax.f32 %v662, 0.0
  %v713 = vmax.f32 %v667, 0.0
  %v714 = vmax.f32 %v672, 0.0
  %v715 = vmax.f32 %v677, 0.0
  %v716 = vmax.f32 %v682, 0.0
  %v717 = vmax.f32 %v687, 0.0
  %v718 = vmax.f32 %v692, 0.0
  %v719 = vmax.f32 %v697, 0.0
  %v720 = vmax.f32 %v702, 0.0
  %v721 = vld [vmem:[%s7] sm:$0x1]
  %v723 = vlaneseq
  %v724 = vshrl.u32 %v723, 7
  %v725 = vsub.s32 0, %v724
  %v726 = vrot.slane %v721, %v725
  %v728 = vmul.f32 %v705, %v726
  %v729 = vmul.f32 %v706, %v726
  %v730 = vmul.f32 %v707, %v726
  %v731 = vmul.f32 %v708, %v726
  %v732 = vmul.f32 %v709, %v726
  %v733 = vmul.f32 %v710, %v726
  %v734 = vmul.f32 %v711, %v726
  %v735 = vmul.f32 %v712, %v726
  %v736 = vmul.f32 %v713, %v726
  %v737 = vmul.f32 %v714, %v726
  %v738 = vmul.f32 %v715, %v726
  %v739 = vmul.f32 %v716, %v726
  %v740 = vmul.f32 %v717, %v726
  %v741 = vmul.f32 %v718, %v726
  %v742 = vmul.f32 %v719, %v726
  %v743 = vmul.f32 %v720, %v726
  %v744 = vsel %vm511, %v728, 0.0
  %745 = vadd.xlane.f32.xlu0 %v744
  %v746 = vpop.xlane.xlu0 %745
  %v747 = vsel %vm511, %v729, 0.0
  %748 = vadd.xlane.f32.xlu0 %v747
  %v749 = vpop.xlane.xlu0 %748
  %v750 = vsel %vm511, %v730, 0.0
  %751 = vadd.xlane.f32.xlu0 %v750
  %v752 = vpop.xlane.xlu0 %751
  %v753 = vsel %vm511, %v731, 0.0
  %754 = vadd.xlane.f32.xlu0 %v753
  %v755 = vpop.xlane.xlu0 %754
  %v756 = vsel %vm511, %v732, 0.0
  %757 = vadd.xlane.f32.xlu0 %v756
  %v758 = vpop.xlane.xlu0 %757
  %v759 = vsel %vm511, %v733, 0.0
  %760 = vadd.xlane.f32.xlu0 %v759
  %v761 = vpop.xlane.xlu0 %760
  %v762 = vsel %vm511, %v734, 0.0
  %763 = vadd.xlane.f32.xlu0 %v762
  %v764 = vpop.xlane.xlu0 %763
  %v765 = vsel %vm511, %v735, 0.0
  %766 = vadd.xlane.f32.xlu0 %v765
  %v767 = vpop.xlane.xlu0 %766
  %v768 = vsel %vm511, %v736, 0.0
  %769 = vadd.xlane.f32.xlu0 %v768
  %v770 = vpop.xlane.xlu0 %769
  %v771 = vsel %vm511, %v737, 0.0
  %772 = vadd.xlane.f32.xlu0 %v771
  %v773 = vpop.xlane.xlu0 %772
  %v774 = vsel %vm511, %v738, 0.0
  %775 = vadd.xlane.f32.xlu0 %v774
  %v776 = vpop.xlane.xlu0 %775
  %v777 = vsel %vm511, %v739, 0.0
  %778 = vadd.xlane.f32.xlu0 %v777
  %v779 = vpop.xlane.xlu0 %778
  %v780 = vsel %vm511, %v740, 0.0
  %781 = vadd.xlane.f32.xlu0 %v780
  %v782 = vpop.xlane.xlu0 %781
  %v783 = vsel %vm511, %v741, 0.0
  %784 = vadd.xlane.f32.xlu0 %v783
  %v785 = vpop.xlane.xlu0 %784
  %v786 = vsel %vm511, %v742, 0.0
  %787 = vadd.xlane.f32.xlu0 %v786
  %v788 = vpop.xlane.xlu0 %787
  %v789 = vsel %vm511, %v743, 0.0
  %790 = vadd.xlane.f32.xlu0 %v789
  %v791 = vpop.xlane.xlu0 %790
  %v792 = vld [vmem:[#allocation2] sm:$0x1]
  %v794 = vlaneseq
  %v795 = vshrl.u32 %v794, 7
  %v796 = vsub.s32 0, %v795
  %v797 = vrot.slane %v792, %v796
  %v799 = vadd.f32 %v746, %v797
  %v800 = vadd.f32 %v749, %v797
  %v801 = vadd.f32 %v752, %v797
  %v802 = vadd.f32 %v755, %v797
  %v803 = vadd.f32 %v758, %v797
  %v804 = vadd.f32 %v761, %v797
  %v805 = vadd.f32 %v764, %v797
  %v806 = vadd.f32 %v767, %v797
  %v807 = vadd.f32 %v770, %v797
  %v808 = vadd.f32 %v773, %v797
  %v809 = vadd.f32 %v776, %v797
  %v810 = vadd.f32 %v779, %v797
  %v811 = vadd.f32 %v782, %v797
  %v812 = vadd.f32 %v785, %v797
  %v813 = vadd.f32 %v788, %v797
  %v814 = vadd.f32 %v791, %v797
  %vm815 = vcmask 7168
  %816 = vst.msk [vmem:[%s9] sm:$0xff] %vm815, %v799
  %817 = vst.msk [vmem:[%s9 + $0x8] sm:$0xff] %vm815, %v800
  %818 = vst.msk [vmem:[%s9 + $0x10] sm:$0xff] %vm815, %v801
  %819 = vst.msk [vmem:[%s9 + $0x18] sm:$0xff] %vm815, %v802
  %820 = vst.msk [vmem:[%s9 + $0x20] sm:$0xff] %vm815, %v803
  %821 = vst.msk [vmem:[%s9 + $0x28] sm:$0xff] %vm815, %v804
  %822 = vst.msk [vmem:[%s9 + $0x30] sm:$0xff] %vm815, %v805
  %823 = vst.msk [vmem:[%s9 + $0x38] sm:$0xff] %vm815, %v806
  %824 = vst.msk [vmem:[%s9 + $0x40] sm:$0xff] %vm815, %v807
  %825 = vst.msk [vmem:[%s9 + $0x48] sm:$0xff] %vm815, %v808
  %826 = vst.msk [vmem:[%s9 + $0x50] sm:$0xff] %vm815, %v809
  %827 = vst.msk [vmem:[%s9 + $0x58] sm:$0xff] %vm815, %v810
  %828 = vst.msk [vmem:[%s9 + $0x60] sm:$0xff] %vm815, %v811
  %829 = vst.msk [vmem:[%s9 + $0x68] sm:$0xff] %vm815, %v812
  %830 = vst.msk [vmem:[%s9 + $0x70] sm:$0xff] %vm815, %v813
  %831 = vst.msk [vmem:[%s9 + $0x78] sm:$0xff] %vm815, %v814
  // Predicated region
  $region38: #{tpu_custom_call.1} parent=0 // pred_check
    _
  $region39: #{tpu_custom_call.1} parent=0 // pred_check_branch
    %833 = sbr.rel (0) target = $region41
  $region40: #{tpu_custom_call.1} parent=0 // pred_region
    _
  $region41: #{tpu_custom_call.1} parent=0 // pred_fallthru
    _
  // Predicated region
  $region42: #{tpu_custom_call.1} parent=0 // pred_check
    _
  $region43: #{tpu_custom_call.1} parent=0 // pred_check_branch
    %835 = sbr.rel (0) target = $region45
  $region44: #{tpu_custom_call.1} parent=0 // pred_region
    _
  $region45: #{tpu_custom_call.1} parent=0 // pred_fallthru
    _

</llo_original>
